<compile_context>
chip_gen: v5e
topology: v5e:2x2
jax: 0.10.0
libtpu: 0.0.40
codegen_flags: <defaults>
</compile_context>

<pallas_src>
import functools

import jax
import jax.numpy as jnp
from jax import lax
from jax.experimental import pallas as pl
from jax.experimental.pallas import tpu as pltpu


def _index_sampler_kernel(h_ref, q_ref, w2t_ref, b2_ref, v_ref, bv_ref, g_ref,
                          logits_ref, idx_ref, *, tanh_constant):
    # --- wh = h[-1] @ W2^T + b2  (single tiny MXU matmul) --------------------
    h_last = h_ref[0]                                           # [B, L], B == 1
    wh = jnp.dot(h_last, w2t_ref[...],
                 preferred_element_type=jnp.float32) + b2_ref[...]   # [1, L]

    # --- t = tanh(query + wh)  (sublane broadcast of the [1, L] row) --------
    t = jnp.tanh(q_ref[...] + wh)                               # [N, L]

    # --- v_attn: VPU multiply + XLU lane reduce (MXU would be >99% idle) ----
    # v_ref / bv_ref already carry the 1/temperature factor (folded on host).
    logits = jnp.sum(t * v_ref[...], axis=-1, keepdims=True) + bv_ref[0]   # [N, 1]

    # --- TempAndTC (temperature already folded; only tanh_constant remains) -
    if tanh_constant is not None:
        logits = jnp.float32(tanh_constant) * jnp.tanh(logits)

    logits_ref[...] = logits.astype(logits_ref.dtype)

    # --- index = multinomial(exp(logits), 1) via Gumbel-max -----------------
    scores = logits + g_ref[...]                                # [N, 1]
    n = scores.shape[0]
    ids = lax.broadcasted_iota(jnp.int32, scores.shape, 0)
    m = jnp.max(scores)
    idx = jnp.min(jnp.where(scores >= m, ids, jnp.int32(n)))
    idx_ref[0] = idx


def index_sampler_forward(h, query, params, key, temperature=None, tanh_constant=None):
    """h: [layer_num, batch, lstm_size] (batch == 1), query: [node_num, lstm_size].

    Returns (index [int32 scalar], logits [1, node_num])."""
    layer_num, B, L = h.shape
    N = query.shape[0]

    w2t = params["w2"].T                       # [L_in, L_out] for h_last @ W2^T
    b2 = params["b2"].reshape(1, L)
    v_row = params["v_w"].astype(jnp.float32)  # [1, L]
    bv = params["v_b"].reshape(1).astype(jnp.float32)
    if temperature is not None:
        # logits/T == tanh(...) @ (v/T)^T + bv/T  -> fold, drop in-kernel divide.
        inv_t = jnp.float32(1.0 / float(temperature))
        v_row = v_row * inv_t
        bv = bv * inv_t

    # Standard Gumbel noise generated host-side (Gumbel-max == multinomial(exp)).
    gumbel = jax.random.gumbel(key, (N, 1), jnp.float32)

    kernel = functools.partial(_index_sampler_kernel, tanh_constant=tanh_constant)

    logits_col, idx = pl.pallas_call(
        kernel,
        grid=(1,),
        out_shape=(jax.ShapeDtypeStruct((N, 1), jnp.float32),
                   jax.ShapeDtypeStruct((1,), jnp.int32)),
        in_specs=[
            # h: slice of the last layer folded into the BlockSpec DMA.
            pl.BlockSpec((1, B, L), lambda i: (layer_num - 1, 0, 0)),
            pl.BlockSpec(memory_space=pltpu.MemorySpace.VMEM),   # query   [N, L]
            pl.BlockSpec(memory_space=pltpu.MemorySpace.VMEM),   # W2^T    [L, L]
            pl.BlockSpec(memory_space=pltpu.MemorySpace.VMEM),   # b2      [1, L]
            pl.BlockSpec(memory_space=pltpu.MemorySpace.VMEM),   # v/T     [1, L]
            pl.BlockSpec(memory_space=pltpu.MemorySpace.SMEM),   # bv/T    [1]
            pl.BlockSpec(memory_space=pltpu.MemorySpace.VMEM),   # gumbel  [N, 1]
        ],
        out_specs=(
            pl.BlockSpec(memory_space=pltpu.MemorySpace.VMEM),   # logits  [N, 1]
            pl.BlockSpec(memory_space=pltpu.MemorySpace.SMEM),   # index   [1]
        ),
    )(h, query, w2t, b2, v_row, bv, gumbel)

    # [N, 1] -> [1, N] is a free (metadata-only) reshape, matching logits.view(1, -1).
    return idx[0], logits_col.reshape(1, N)


def init_params(key, lstm_size):
    """Deterministic synthetic parameters matching IndexSampler.__init__ shapes."""
    k1, k2, k3, k4 = jax.random.split(key, 4)
    bound = 1.0 / float(jnp.sqrt(lstm_size))
    # nn.Linear(lstm_size, lstm_size): weight [L, L], bias [L]
    w2 = jax.random.uniform(k1, (lstm_size, lstm_size), jnp.float32, -bound, bound)
    b2 = jax.random.uniform(k2, (lstm_size,), jnp.float32, -bound, bound)
    # nn.Linear(lstm_size, 1): weight [1, L], bias [1]
    vw = jax.random.uniform(k3, (1, lstm_size), jnp.float32, -bound, bound)
    vb = jax.random.uniform(k4, (1,), jnp.float32, -bound, bound)
    return {"w2": w2, "b2": b2, "v_w": vw, "v_b": vb}


def _reference_logits(h, query, params, temperature, tanh_constant):
    wh = h[-1].astype(jnp.float32) @ params["w2"].T + params["b2"]       # [1, L]
    t = jnp.tanh(query.astype(jnp.float32) + wh)                         # [N, L]
    logits = (t @ params["v_w"].T + params["v_b"]).reshape(1, -1)        # [1, N]
    if temperature is not None:
        logits = logits / temperature
    if tanh_constant is not None:
        logits = tanh_constant * jnp.tanh(logits)
    return logits


if __name__ == "__main__":
    layer_num, batch, lstm_size, node_num = 2, 1, 32, 8
    temperature, tanh_constant = 5.0, 2.5

    key = jax.random.PRNGKey(0)
    k_h, k_q, k_p, k_g = jax.random.split(key, 4)

    h = jax.random.normal(k_h, (layer_num, batch, lstm_size), jnp.float32)
    query = jax.random.normal(k_q, (node_num, lstm_size), jnp.float32)
    params = init_params(k_p, lstm_size)

    index, logits = index_sampler_forward(h, query, params, k_g,
                                          temperature=temperature,
                                          tanh_constant=tanh_constant)
    jax.block_until_ready((index, logits))

    ref = _reference_logits(h, query, params, temperature, tanh_constant)
    assert logits.shape == (1, node_num)
    assert jnp.allclose(logits, ref, atol=1e-5, rtol=1e-5), "logits mismatch vs reference"
    assert 0 <= int(index) < node_num, "sampled index out of range"

    print("KERNEL_OK")
</pallas_src>

<mosaic_0001>
module attributes {stable_mosaic.version = 11 : i64} {
  func.func @_index_sampler_kernel(%arg0: i32, %arg1: memref<1x1x32xf32, #tpu.memory_space<vmem>>, %arg2: memref<8x32xf32, #tpu.memory_space<vmem>>, %arg3: memref<32x32xf32, #tpu.memory_space<vmem>>, %arg4: memref<1x32xf32, #tpu.memory_space<vmem>>, %arg5: memref<1x32xf32, #tpu.memory_space<vmem>>, %arg6: memref<1xf32, #tpu.memory_space<smem>>, %arg7: memref<8x1xf32, #tpu.memory_space<vmem>>, %arg8: memref<8x1xf32, #tpu.memory_space<vmem>>, %arg9: memref<1xi32, #tpu.memory_space<smem>>) attributes {dimension_semantics = [#tpu.dimension_semantics<arbitrary>], iteration_bounds = array<i64: 1>, scalar_prefetch = 0 : i64, scratch_operands = 0 : i64, tpu.core_type = #tpu.core_type<tc>, window_params = [{transform_indices = @transform_0, window_bounds = array<i64: 1, 1, 32>}, {pipeline_mode = #tpu.pipeline_mode<synchronous>, transform_indices = @transform_1, window_bounds = array<i64: 8, 32>}, {pipeline_mode = #tpu.pipeline_mode<synchronous>, transform_indices = @transform_2, window_bounds = array<i64: 32, 32>}, {pipeline_mode = #tpu.pipeline_mode<synchronous>, transform_indices = @transform_3, window_bounds = array<i64: 1, 32>}, {pipeline_mode = #tpu.pipeline_mode<synchronous>, transform_indices = @transform_4, window_bounds = array<i64: 1, 32>}, {transform_indices = @transform_5, window_bounds = array<i64: 1>}, {pipeline_mode = #tpu.pipeline_mode<synchronous>, transform_indices = @transform_6, window_bounds = array<i64: 8, 1>}, {pipeline_mode = #tpu.pipeline_mode<synchronous>, transform_indices = @transform_7, window_bounds = array<i64: 8, 1>}, {transform_indices = @transform_8, window_bounds = array<i64: 1>}]} {
    %c0 = arith.constant 0 : index
    %c0_0 = arith.constant 0 : index
    %c0_1 = arith.constant 0 : index
    %0 = vector.load %arg1[%c0, %c0_0, %c0_1] : memref<1x1x32xf32, #tpu.memory_space<vmem>>, vector<1x1x32xf32>
    %1 = vector.shape_cast %0 : vector<1x1x32xf32> to vector<1x32xf32>
    %c0_2 = arith.constant 0 : index
    %c0_3 = arith.constant 0 : index
    %2 = vector.load %arg3[%c0_2, %c0_3] : memref<32x32xf32, #tpu.memory_space<vmem>>, vector<32x32xf32>
    %cst = arith.constant dense<0.000000e+00> : vector<1x32xf32>
    %3 = tpu.matmul %1, %2, %cst {dimension_numbers = #tpu.dot_dimension_numbers<[1], [0], [0], [1], [0, 0, 1, 1], [], []>} : vector<1x32xf32>, vector<32x32xf32>, vector<1x32xf32> -> vector<1x32xf32>
    %c0_4 = arith.constant 0 : index
    %c0_5 = arith.constant 0 : index
    %4 = vector.load %arg4[%c0_4, %c0_5] : memref<1x32xf32, #tpu.memory_space<vmem>>, vector<1x32xf32>
    %5 = arith.addf %3, %4 : vector<1x32xf32>
    %c0_6 = arith.constant 0 : index
    %c0_7 = arith.constant 0 : index
    %6 = vector.load %arg2[%c0_6, %c0_7] : memref<8x32xf32, #tpu.memory_space<vmem>>, vector<8x32xf32>
    %7 = vector.broadcast %5 : vector<1x32xf32> to vector<8x32xf32>
    %8 = arith.addf %6, %7 : vector<8x32xf32>
    %9 = math.tanh %8 : vector<8x32xf32>
    %c0_8 = arith.constant 0 : index
    %c0_9 = arith.constant 0 : index
    %10 = vector.load %arg5[%c0_8, %c0_9] : memref<1x32xf32, #tpu.memory_space<vmem>>, vector<1x32xf32>
    %11 = vector.broadcast %10 : vector<1x32xf32> to vector<8x32xf32>
    %12 = arith.mulf %9, %11 : vector<8x32xf32>
    %cst_10 = arith.constant dense<0.000000e+00> : vector<8xf32>
    %13 = vector.multi_reduction <add>, %12, %cst_10 [1] : vector<8x32xf32> to vector<8xf32>
    %14 = vector.shape_cast %13 : vector<8xf32> to vector<8x1xf32>
    %c0_11 = arith.constant 0 : index
    %15 = memref.load %arg6[%c0_11] : memref<1xf32, #tpu.memory_space<smem>>
    %16 = vector.broadcast %15 : f32 to vector<8x1xf32>
    %17 = arith.addf %14, %16 : vector<8x1xf32>
    %18 = math.tanh %17 : vector<8x1xf32>
    %cst_12 = arith.constant 2.500000e+00 : f32
    %19 = vector.broadcast %cst_12 : f32 to vector<8x1xf32>
    %20 = arith.mulf %19, %18 : vector<8x1xf32>
    %c0_13 = arith.constant 0 : index
    %c0_14 = arith.constant 0 : index
    %21 = vector.load %arg8[%c0_13, %c0_14] : memref<8x1xf32, #tpu.memory_space<vmem>>, vector<8x1xf32>
    tpu.vector_store %arg8[%c0_13, %c0_14], %20 {strides = array<i32>} : memref<8x1xf32, #tpu.memory_space<vmem>>, vector<8x1xf32>,
    %c0_15 = arith.constant 0 : index
    %c0_16 = arith.constant 0 : index
    %22 = vector.load %arg7[%c0_15, %c0_16] : memref<8x1xf32, #tpu.memory_space<vmem>>, vector<8x1xf32>
    %23 = arith.addf %20, %22 : vector<8x1xf32>
    %24 = tpu.iota {dimensions = array<i32: 0>} : vector<8x1xi32>
    %25 = vector.shape_cast %23 : vector<8x1xf32> to vector<1x8x1xf32>
    %cst_17 = arith.constant dense<0xFF800000> : vector<1xf32>
    %26 = vector.multi_reduction <maximumf>, %25, %cst_17 [1, 2] : vector<1x8x1xf32> to vector<1xf32>
    %27 = vector.shape_cast %26 : vector<1xf32> to vector<1x1x1xf32>
    %28 = vector.extract %27[0, 0, 0] : f32 from vector<1x1x1xf32>
    %29 = vector.broadcast %28 : f32 to vector<8x1xf32>
    %30 = arith.cmpf oge, %23, %29 : vector<8x1xf32>
    %c8_i32 = arith.constant 8 : i32
    %31 = vector.broadcast %c8_i32 : i32 to vector<8x1xi32>
    %32 = arith.select %30, %24, %31 : vector<8x1xi1>, vector<8x1xi32>
    %33 = vector.shape_cast %32 : vector<8x1xi32> to vector<1x8x1xi32>
    %cst_18 = arith.constant dense<2147483647> : vector<1xi32>
    %34 = vector.multi_reduction <minsi>, %33, %cst_18 [1, 2] : vector<1x8x1xi32> to vector<1xi32>
    %35 = vector.shape_cast %34 : vector<1xi32> to vector<1x1x1xi32>
    %36 = vector.extract %35[0, 0, 0] : i32 from vector<1x1x1xi32>
    %c0_19 = arith.constant 0 : index
    %37 = memref.load %arg9[%c0_19] : memref<1xi32, #tpu.memory_space<smem>>
    memref.store %36, %arg9[%c0_19] : memref<1xi32, #tpu.memory_space<smem>>
    return
  }
  func.func @transform_0(%arg0: i32) -> (i32, i32, i32) {
    %c1_i32 = arith.constant 1 : i32
    %c0_i32 = arith.constant 0 : i32
    %c0_i32_0 = arith.constant 0 : i32
    %c0_i32_1 = arith.constant 0 : i32
    return %c1_i32, %c0_i32, %c0_i32_0 : i32, i32, i32
  }
  func.func @transform_1(%arg0: i32) -> (i32, i32) {
    %c0_i32 = arith.constant 0 : i32
    %c0_i32_0 = arith.constant 0 : i32
    %c0_i32_1 = arith.constant 0 : i32
    return %c0_i32, %c0_i32_0 : i32, i32
  }
  func.func @transform_2(%arg0: i32) -> (i32, i32) {
    %c0_i32 = arith.constant 0 : i32
    %c0_i32_0 = arith.constant 0 : i32
    %c0_i32_1 = arith.constant 0 : i32
    return %c0_i32, %c0_i32_0 : i32, i32
  }
  func.func @transform_3(%arg0: i32) -> (i32, i32) {
    %c0_i32 = arith.constant 0 : i32
    %c0_i32_0 = arith.constant 0 : i32
    %c0_i32_1 = arith.constant 0 : i32
    return %c0_i32, %c0_i32_0 : i32, i32
  }
  func.func @transform_4(%arg0: i32) -> (i32, i32) {
    %c0_i32 = arith.constant 0 : i32
    %c0_i32_0 = arith.constant 0 : i32
    %c0_i32_1 = arith.constant 0 : i32
    return %c0_i32, %c0_i32_0 : i32, i32
  }
  func.func @transform_5(%arg0: i32) -> i32 {
    %c0_i32 = arith.constant 0 : i32
    %c0_i32_0 = arith.constant 0 : i32
    return %c0_i32 : i32
  }
  func.func @transform_6(%arg0: i32) -> (i32, i32) {
    %c0_i32 = arith.constant 0 : i32
    %c0_i32_0 = arith.constant 0 : i32
    %c0_i32_1 = arith.constant 0 : i32
    return %c0_i32, %c0_i32_0 : i32, i32
  }
  func.func @transform_7(%arg0: i32) -> (i32, i32) {
    %c0_i32 = arith.constant 0 : i32
    %c0_i32_0 = arith.constant 0 : i32
    %c0_i32_1 = arith.constant 0 : i32
    return %c0_i32, %c0_i32_0 : i32, i32
  }
  func.func @transform_8(%arg0: i32) -> i32 {
    %c0_i32 = arith.constant 0 : i32
    %c0_i32_0 = arith.constant 0 : i32
    return %c0_i32 : i32
  }
}

</mosaic_0001>

<llo_original>
// kernel: tpu_custom_call.1
$region0: #{tpu_custom_call.1}
  #allocation0 [shape = 'u32[]', space=smem, size = 0x4, offset = 0x4, fixed_abs, tag = 'smem constant byte address 0x4 - core index']
  #allocation1 [shape = 'u32[72,128]{1,0:T(1,128)}', space=vmem, size = 0x9000, scoped, tag = 'internal scratch']
  #allocation2 [shape = 'f32[1]{0:T(128)S(6)}', space=smem, size = 0x200, scoped, tag = 'scoped memory for tpu_custom_call.1']
  %s0 = inlined_call_operand.vmem [shape: f32[2,1,32], index: 0, kind: input, shape index: {}]
  %s1 = inlined_call_operand.vmem [shape: f32[8,32], index: 1, kind: input, shape index: {}]
  %s2 = inlined_call_operand.hbm [shape: f32[32,32], index: 2, kind: input, shape index: {}]
  %s3 = inlined_call_operand.vmem [shape: f32[1,32], index: 3, kind: input, shape index: {}]
  %s4 = inlined_call_operand.vmem [shape: f32[1,32], index: 4, kind: input, shape index: {}]
  %s5 = inlined_call_operand.<no memory space> [shape: f32[1], index: 5, kind: input, shape index: {}]
  %s6 = inlined_call_operand.vmem [shape: f32[8,1], index: 6, kind: input, shape index: {}]
  %s7 = inlined_call_operand.vmem [shape: f32[8,1], index: 7, kind: output, shape index: {0}]
  %s8 = inlined_call_operand.hbm [shape: s32[1], index: 8, kind: output, shape index: {1}]
  %9 = xla_tuple %s7, %s8
  %s10 = sld [smem:[#allocation0]]
  $region50: #{tpu_custom_call.1} parent=0
    _
  %s12 = ssub.s32 1, %s10
  %s13 = scalar_select 0, %s12, %s10
  %14 = sst [smem:[#allocation2]] %s5
  $region1: #{tpu_custom_call.1} parent=0
    #allocation3 [shape = 'u8[16384]{0}', space=vmem, size = 0x4000, scoped, tag = 'input window, operand 2, single buffered']
    #allocation4 [shape = 's32[1]{0}', space=sflag, size = 0x4, scoped, tag = 'scoped memory for tpu_custom_call.1']
    #allocation5 [shape = 's32[1]{0}', space=sflag, size = 0x4, scoped, tag = 'scoped memory for tpu_custom_call.1']
    #allocation6 [shape = 'u8[512]{0}', space=smem, size = 0x200, scoped, tag = 'output window, operand 1, single buffered']
    %15 = vsyncpa [#allocation4], 0
    %16 = vsyncpa [#allocation5], 0
    // Predicated region
    $region2: #{tpu_custom_call.1} parent=1 // pred_check
      _
    $region3: #{tpu_custom_call.1} parent=1 // pred_check_branch
      %18 = sbr.rel (0) target = $region5
    $region4: #{tpu_custom_call.1} parent=1 // pred_region
      %s19 = scalar_lea.vmem %s0, 1
    $region5: #{tpu_custom_call.1} parent=1 // pred_fallthru
      _
    // Predicated region
    $region6: #{tpu_custom_call.1} parent=1 // pred_check
      _
    $region7: #{tpu_custom_call.1} parent=1 // pred_check_branch
      %21 = sbr.rel (0) target = $region9
    $region8: #{tpu_custom_call.1} parent=1 // pred_region
      _
    $region9: #{tpu_custom_call.1} parent=1 // pred_fallthru
      _
    // Predicated region
    $region10: #{tpu_custom_call.1} parent=1 // pred_check
      _
    $region11: #{tpu_custom_call.1} parent=1 // pred_check_branch
      %23 = sbr.rel (0) target = $region13
    $region12: #{tpu_custom_call.1} parent=1 // pred_region
      %25 = vsyncadd [#allocation4], 0
      %s26 = sshll.u32 %s2, 4
      %s27 = int_to_ptr.hbm [resolvable:$true] %s26
      %s28 = sshll.u32 [#allocation3], 4
      %s29 = int_to_ptr.vmem [resolvable:$true] %s28
      %34 = dma.hbm_to_vmem [thread:$0]  %s27, 512, %s29, [#allocation4], 128, 128, 8
    $region13: #{tpu_custom_call.1} parent=1 // pred_fallthru
      _
    // Predicated region
    $region14: #{tpu_custom_call.1} parent=1 // pred_check
      _
    $region15: #{tpu_custom_call.1} parent=1 // pred_check_branch
      %36 = sbr.rel (0) target = $region17
    $region16: #{tpu_custom_call.1} parent=1 // pred_region
      _
    $region17: #{tpu_custom_call.1} parent=1 // pred_fallthru
      _
    // Predicated region
    $region18: #{tpu_custom_call.1} parent=1 // pred_check
      _
    $region19: #{tpu_custom_call.1} parent=1 // pred_check_branch
      %38 = sbr.rel (0) target = $region21
    $region20: #{tpu_custom_call.1} parent=1 // pred_region
      _
    $region21: #{tpu_custom_call.1} parent=1 // pred_fallthru
      _
    // Predicated region
    $region22: #{tpu_custom_call.1} parent=1 // pred_check
      _
    $region23: #{tpu_custom_call.1} parent=1 // pred_check_branch
      %40 = sbr.rel (0) target = $region25
    $region24: #{tpu_custom_call.1} parent=1 // pred_region
      _
    $region25: #{tpu_custom_call.1} parent=1 // pred_fallthru
      _
    // Predicated region
    $region26: #{tpu_custom_call.1} parent=1 // pred_check
      _
    $region27: #{tpu_custom_call.1} parent=1 // pred_check_branch
      %42 = sbr.rel (0) target = $region29
    $region28: #{tpu_custom_call.1} parent=1 // pred_region
      _
    $region29: #{tpu_custom_call.1} parent=1 // pred_fallthru
      _
    // Predicated region
    $region30: #{tpu_custom_call.1} parent=1 // pred_check
      _
    $region31: #{tpu_custom_call.1} parent=1 // pred_check_branch
      %44 = sbr.rel (0) target = $region33
    $region32: #{tpu_custom_call.1} parent=1 // pred_region
      %46 = dma.done [#allocation4], 512
    $region33: #{tpu_custom_call.1} parent=1 // pred_fallthru
      _
    %s47 = scalar_lea.vmem %s0, 1
    %s48 = scalar_lea.vmem %s0, 1
    %v49 = vld [vmem:[%s48] sm:$0x1]
    %v50 = vld [vmem:[#allocation3] sm:$0xff]
    %v51 = vld [vmem:[#allocation3 + $0x8] sm:$0xff]
    %v52 = vld [vmem:[#allocation3 + $0x10] sm:$0xff]
    %v53 = vld [vmem:[#allocation3 + $0x18] sm:$0xff]
    %v54 = vld [vmem:[%s3] sm:$0x1]
    %vm55 = vcmask 261120
    %v57 = vsel %vm55, %v49, 0
    %59 = vmatpush.msra.mxu0 0.0
    %60 = vmatpush.msra.mxu0 0.0
    %61 = vmatpush.msra.mxu0 0.0
    %62 = vmatpush.msra.mxu0 0.0
    %63 = vmatpush.msra.mxu0 0.0
    %64 = vmatpush.msra.mxu0 0.0
    %65 = vmatpush.msra.mxu0 0.0
    %66 = vmatpush.msra.mxu0 0.0
    %67 = vmatpush.msra.mxu0 0.0
    %68 = vmatpush.msra.mxu0 0.0
    %69 = vmatpush.msra.mxu0 0.0
    %70 = vmatpush.msra.mxu0 0.0
    %71 = vmatpush.msra.mxu0 %v53
    %72 = vmatpush.msra.mxu0 %v52
    %73 = vmatpush.msra.mxu0 %v51
    %74 = vmatpush.msra.mxu0 %v50
    %75 = vmatmul.f32.gmra.mxu0 %v57
    %v76 = vpop.f32.mrf.mxu0
    %v77 = vadd.f32 %v54, %v76
    %78 = vdwg.mxu0
    %v79 = vld [vmem:[%s1] sm:$0xff]
    %v80 = vperm.slane %v77, 0
    %v81 = vadd.f32 %v79, %v80
    %v82 = vtanh.pop %v81
    %v83 = vld [vmem:[%s4] sm:$0x1]
    %v85 = vperm.slane %v83, 0
    %v87 = vmul.f32 %v82, %v85
    %v88 = vsel %vm55, %v87, 0.0
    %89 = vadd.xlane.f32.xlu0 %v88
    %v90 = vpop.xlane.xlu0 %89
    %s91 = sld [smem:[#allocation2]]
    %v92 = vstv %s91
    %v93 = vadd.f32 %v90, %v92
    %v94 = vtanh.pop %v93
    %v95 = vmul.f32 %v94, 2.5
    %vm96 = vcmask 7168
    %97 = vst.msk [vmem:[%s7] sm:$0xff] %vm96, %v95
    %v98 = vld [vmem:[%s6] sm:$0xff]
    %v99 = vadd.f32 %v95, %v98
    %v100 = vlaneseq
    %v101 = vshrl.u32 %v100, 7
    %v102 = vsel %vm96, %v99, -inf
    %103 = vmax.xlane.f32.xlu0 %v102
    %v104 = vpop.xlane.xlu0 %103
    %v105 = vrot.slane %v104, 4
    %v106 = vmax.f32 %v104, %v105
    %v107 = vrot.slane %v106, 2
    %v108 = vmax.f32 %v106, %v107
    %v109 = vrot.slane %v108, 1
    %v110 = vmax.f32 %v108, %v109
    %s111 = vtos %v110
    %v112 = vstv %s111
    %vm113 = vcmp.ge.f32.partialorder %v99, %v112
    %v114 = vsel %vm113, %v101, 8
    %v115 = vsel %vm96, %v114, 2147483647
    %v116 = vand.u32 %v115, 65535
    %v117 = vshra.s32 %v115, 16
    %v118 = vcvt.s32.f32 %v116
    %v119 = vcvt.s32.f32 %v117
    %120 = vmin.xlane.f32.xlu0 %v119
    %v121 = vpop.xlane.xlu0 %120
    %vm122 = vcmp.eq.f32.partialorder %v119, %v121
    %v123 = vsel %vm122, %v118, inf
    %124 = vmin.xlane.f32.xlu0 %v123
    %v125 = vpop.xlane.xlu0 %124
    %v126 = vcvt.f32.s32 %v125
    %v127 = vcvt.f32.s32 %v121
    %v128 = vshll.u32 %v127, 16
    %v129 = vadd.s32 %v128, %v126
    %v130 = vrot.slane %v129, 4
    %vm131 = vcmp.lt.s32.totalorder %v129, %v130
    %v132 = vsel %vm131, %v129, %v130
    %v133 = vrot.slane %v132, 2
    %vm134 = vcmp.lt.s32.totalorder %v132, %v133
    %v135 = vsel %vm134, %v132, %v133
    %v136 = vrot.slane %v135, 1
    %vm137 = vcmp.lt.s32.totalorder %v135, %v136
    %v138 = vsel %vm137, %v135, %v136
    %s139 = vtos %v138
    %s140 = scalar_lea.smem [#allocation6], 0
    %141 = sst [smem:[%s140]] %s139
    // Predicated region
    $region34: #{tpu_custom_call.1} parent=1 // pred_check
      _
    $region35: #{tpu_custom_call.1} parent=1 // pred_check_branch
      %143 = sbr.rel (0) target = $region37
    $region36: #{tpu_custom_call.1} parent=1 // pred_region
      _
    $region37: #{tpu_custom_call.1} parent=1 // pred_fallthru
      _
    // Predicated region
    $region38: #{tpu_custom_call.1} parent=1 // pred_check
      _
    $region39: #{tpu_custom_call.1} parent=1 // pred_check_branch
      %145 = sbr.rel (0) target = $region41
    $region40: #{tpu_custom_call.1} parent=1 // pred_region
      %147 = vsyncadd [#allocation5], 0
      %s149 = sshll.u32 %s8, 4
      %s150 = int_to_ptr.hbm [resolvable:$true] %s149
      %152 = dma.smem_to_hbm [#allocation6], 16, %s150, [#allocation5]
    $region41: #{tpu_custom_call.1} parent=1 // pred_fallthru
      _
    // Predicated region
    $region42: #{tpu_custom_call.1} parent=1 // pred_check
      _
    $region43: #{tpu_custom_call.1} parent=1 // pred_check_branch
      %154 = sbr.rel (0) target = $region45
    $region44: #{tpu_custom_call.1} parent=1 // pred_region
      _
    $region45: #{tpu_custom_call.1} parent=1 // pred_fallthru
      _
    // Predicated region
    $region46: #{tpu_custom_call.1} parent=1 // pred_check
      _
    $region47: #{tpu_custom_call.1} parent=1 // pred_check_branch
      %156 = sbr.rel (0) target = $region49
    $region48: #{tpu_custom_call.1} parent=1 // pred_region
      %158 = dma.done [#allocation5], 16
    $region49: #{tpu_custom_call.1} parent=1 // pred_fallthru
      _
    %159 = sfence
    %160 = vsyncpa [#allocation4], 1
    %161 = vsyncpa [#allocation5], 1

</llo_original>
